<compile_context>
chip_gen: v6e
topology: v6e:2x2x1
jax: 0.10.0
libtpu: 0.0.40
codegen_flags: <defaults>
</compile_context>

<pallas_src>
import functools

import jax
import jax.numpy as jnp
import numpy as np
from jax import lax
from jax.experimental import pallas as pl
from jax.experimental.pallas import tpu as pltpu

_LANE = 128
_SUBLANE = 8


def _distance_loss_kernel(x_ref, sum_ref, min_ref, max_ref, *,
                          n_rows, tile_rows, steps, needs_mask):
    ci = pl.program_id(0)          # core (parallel) axis
    i = pl.program_id(1)           # streaming (arbitrary) axis

    xf = x_ref[...].astype(jnp.float32)                    # (tm, C), f32 accumulation
    groups = tile_rows // _SUBLANE
    # Sublane-tile aligned split: (tm, C) -> (tm/8, 8, C) is layout-free, so the
    # per-tile folds below are pure elementwise VALU ops (no per-step XLU reduce).
    xr = xf.reshape(groups, _SUBLANE, xf.shape[1])

    @pl.when(i == 0)
    def _init():
        sum_ref[...] = jnp.zeros_like(sum_ref)
        min_ref[...] = jnp.full_like(min_ref, jnp.inf)
        max_ref[...] = jnp.full_like(max_ref, -jnp.inf)

    # Row padding is zero-filled in the wrapper, so the unmasked sum is exact.
    sum_ref[...] += jnp.sum(xr, axis=0, keepdims=True)

    def _minmax(vmin, vmax):
        min_ref[...] = jnp.minimum(min_ref[...], jnp.min(vmin, axis=0, keepdims=True))
        max_ref[...] = jnp.maximum(max_ref[...], jnp.max(vmax, axis=0, keepdims=True))

    if needs_mask:                                         # static: only padded runs pay
        rb = ci * steps + i                                # global row-tile index
        fully_valid = (rb + 1) * tile_rows <= n_rows

        @pl.when(fully_valid)
        def _unmasked():
            _minmax(xr, xr)

        @pl.when(jnp.logical_not(fully_valid))
        def _masked():                                     # only the padded tail tiles
            row = lax.broadcasted_iota(jnp.int32, xf.shape, 0) + rb * tile_rows
            valid = row < n_rows
            vmin = jnp.where(valid, xf, jnp.inf).reshape(xr.shape)
            vmax = jnp.where(valid, xf, -jnp.inf).reshape(xr.shape)
            _minmax(vmin, vmax)
    else:
        _minmax(xr, xr)


def distance_loss(logits, labels, *, tile_rows=None):
    n, c = logits.shape
    itemsize = jnp.dtype(logits.dtype).itemsize
    sub = max(_SUBLANE, 32 // max(itemsize, 1))            # 8 f32 / 16 bf16 / 32 int8

    # Gather term: sum_i logits[labels[i], 0].  O(N), computed in the wrapper on
    # the original (unpadded) logits; removes the counts stream from the kernel.
    gather_sum = jnp.sum(
        jnp.take(logits[:, 0], labels.astype(jnp.int32)).astype(jnp.float32))

    # ---- tile sizing against the scoped-VMEM budget ----------------------
    c_pad = ((c + _LANE - 1) // _LANE) * _LANE             # lane padding in VMEM
    row_bytes = c_pad * itemsize
    try:
        phys_vmem = pltpu.get_tpu_info().vmem_capacity_bytes
    except Exception:
        phys_vmem = 64 * 1024 * 1024                       # v7x per-TC lower bound
    safe_total = min(phys_vmem - (8 << 20), 48 << 20)      # leave headroom
    block_budget = min(8 << 20, safe_total // 3)           # 2 pipeline buffers + slack

    if tile_rows is None:
        tm = max(sub, (block_budget // row_bytes) // sub * sub)
    else:
        tm = max(sub, (int(tile_rows) // sub) * sub)
    n_ceil = ((n + sub - 1) // sub) * sub
    tm = min(tm, n_ceil)

    total_tiles = -(-n // tm)
    num_cores = 2 if total_tiles >= 2 else 1               # v7x: one per TensorCore
    steps = -(-total_tiles // num_cores)
    n_pad = num_cores * steps * tm
    needs_mask = (n_pad != n)
    if needs_mask:
        logits = jnp.pad(logits, ((0, n_pad - n), (0, 0)))

    block_bytes = tm * row_bytes
    out_bytes = 3 * _SUBLANE * c_pad * 4
    vmem_limit = int(min(phys_vmem - (4 << 20),
                         max(32 << 20, 2 * block_bytes + 2 * out_bytes + (8 << 20))))

    kernel = functools.partial(_distance_loss_kernel, n_rows=n, tile_rows=tm,
                               steps=steps, needs_mask=needs_mask)

    part_sds = jax.ShapeDtypeStruct((num_cores, _SUBLANE, c), jnp.float32)
    part_spec = pl.BlockSpec((1, _SUBLANE, c), lambda ci, i: (ci, 0, 0))

    sums, mins, maxs = pl.pallas_call(
        kernel,
        out_shape=(part_sds, part_sds, part_sds),
        grid_spec=pltpu.PrefetchScalarGridSpec(
            num_scalar_prefetch=0,
            grid=(num_cores, steps),
            in_specs=[pl.BlockSpec((tm, c), lambda ci, i: (ci * steps + i, 0))],
            out_specs=(part_spec, part_spec, part_spec),
        ),
        compiler_params=pltpu.CompilerParams(
            dimension_semantics=("parallel", "arbitrary"),
            vmem_limit_bytes=vmem_limit),
    )(logits)

    # Final combine + closed-form loss (tiny, done once in the wrapper).
    s = jnp.sum(sums)
    mn = jnp.min(mins)
    mx = jnp.max(maxs)
    inv = 1.0 / (mx - mn)                                   # NaN if mx == mn, as in torch
    nc = jnp.float32(n * c)
    nr = jnp.float32(n)
    total_xn = nc - (s - nc * mn) * inv                     # sum_ij xn[i, j]
    gather_xn = nr - (gather_sum - nr * mn) * inv           # sum_i xn[labels[i], 0]
    return -(total_xn - gather_xn) / jnp.float32(n * n)


def distance_loss_ref(logits, labels):
    logits = logits.astype(jnp.float32)
    mn = jnp.min(logits)
    mx = jnp.max(logits)
    xn = 1.0 - (logits - mn) / (mx - mn)
    cos_sim = xn.sum(1) - xn[labels, 0]
    return -(cos_sim.sum(0) / logits.shape[0] ** 2)


if __name__ == "__main__":
    key = jax.random.PRNGKey(0)
    k1, k2, k3, k4 = jax.random.split(key, 4)

    # Shapes implied by the module: logits (N, C), labels (N,) with values in [0, N)
    # (the gather is along dim 0, so labels index rows).
    N, C = 8, 32
    logits = jax.random.normal(k1, (N, C), dtype=jnp.float32)
    labels = jax.random.randint(k2, (N,), 0, N, dtype=jnp.int32)

    out = distance_loss(logits, labels)
    jax.block_until_ready(out)
    expected = distance_loss_ref(logits, labels)
    assert np.allclose(np.asarray(out), np.asarray(expected), rtol=1e-5, atol=1e-5), (
        float(out), float(expected))

    # Multi-tile path: 2-way core split, row padding and pl.when-gated masked
    # min/max on the tail tiles.
    N2, C2 = 20, 32
    logits2 = jax.random.normal(k3, (N2, C2), dtype=jnp.float32)
    labels2 = jax.random.randint(k4, (N2,), 0, N2, dtype=jnp.int32)
    out2 = distance_loss(logits2, labels2, tile_rows=8)
    jax.block_until_ready(out2)
    expected2 = distance_loss_ref(logits2, labels2)
    assert np.allclose(np.asarray(out2), np.asarray(expected2), rtol=1e-5, atol=1e-5), (
        float(out2), float(expected2))

    print("KERNEL_OK")
</pallas_src>

<mosaic_0001>
module attributes {stable_mosaic.version = 11 : i64} {
  func.func @_distance_loss_kernel(%arg0: i32, %arg1: i32, %arg2: memref<8x32xf32, #tpu.memory_space<vmem>>, %arg3: memref<1x8x32xf32, #tpu.memory_space<vmem>>, %arg4: memref<1x8x32xf32, #tpu.memory_space<vmem>>, %arg5: memref<1x8x32xf32, #tpu.memory_space<vmem>>) attributes {dimension_semantics = [#tpu.dimension_semantics<parallel>, #tpu.dimension_semantics<arbitrary>], iteration_bounds = array<i64: 1, 1>, scalar_prefetch = 0 : i64, scratch_operands = 0 : i64, tpu.core_type = #tpu.core_type<tc>, window_params = [{transform_indices = @transform_0, window_bounds = array<i64: 8, 32>}, {transform_indices = @transform_1, window_bounds = array<i64: 1, 8, 32>}, {transform_indices = @transform_2, window_bounds = array<i64: 1, 8, 32>}, {transform_indices = @transform_3, window_bounds = array<i64: 1, 8, 32>}]} {
    %c0 = arith.constant 0 : index
    %c0_0 = arith.constant 0 : index
    %0 = vector.load %arg2[%c0, %c0_0] : memref<8x32xf32, #tpu.memory_space<vmem>>, vector<8x32xf32>
    %1 = vector.shape_cast %0 : vector<8x32xf32> to vector<1x8x32xf32>
    %c0_i32 = arith.constant 0 : i32
    %2 = arith.cmpi eq, %arg1, %c0_i32 : i32
    %3 = arith.extui %2 : i1 to i32
    %c0_i32_1 = arith.constant 0 : i32
    %4 = arith.cmpi ne, %3, %c0_i32_1 : i32
    scf.if %4 {
      %cst_22 = arith.constant 0.000000e+00 : f32
      %20 = vector.broadcast %cst_22 : f32 to vector<1x8x32xf32>
      %c0_23 = arith.constant 0 : index
      %c0_24 = arith.constant 0 : index
      %c0_25 = arith.constant 0 : index
      %21 = vector.load %arg3[%c0_23, %c0_24, %c0_25] : memref<1x8x32xf32, #tpu.memory_space<vmem>>, vector<1x8x32xf32>
      tpu.vector_store %arg3[%c0_23, %c0_24, %c0_25], %20 {strides = array<i32>} : memref<1x8x32xf32, #tpu.memory_space<vmem>>, vector<1x8x32xf32>,
      %cst_26 = arith.constant 0x7F800000 : f32
      %22 = vector.broadcast %cst_26 : f32 to vector<1x8x32xf32>
      %c0_27 = arith.constant 0 : index
      %c0_28 = arith.constant 0 : index
      %c0_29 = arith.constant 0 : index
      %23 = vector.load %arg4[%c0_27, %c0_28, %c0_29] : memref<1x8x32xf32, #tpu.memory_space<vmem>>, vector<1x8x32xf32>
      tpu.vector_store %arg4[%c0_27, %c0_28, %c0_29], %22 {strides = array<i32>} : memref<1x8x32xf32, #tpu.memory_space<vmem>>, vector<1x8x32xf32>,
      %cst_30 = arith.constant 0xFF800000 : f32
      %24 = vector.broadcast %cst_30 : f32 to vector<1x8x32xf32>
      %c0_31 = arith.constant 0 : index
      %c0_32 = arith.constant 0 : index
      %c0_33 = arith.constant 0 : index
      %25 = vector.load %arg5[%c0_31, %c0_32, %c0_33] : memref<1x8x32xf32, #tpu.memory_space<vmem>>, vector<1x8x32xf32>
      tpu.vector_store %arg5[%c0_31, %c0_32, %c0_33], %24 {strides = array<i32>} : memref<1x8x32xf32, #tpu.memory_space<vmem>>, vector<1x8x32xf32>,
    } else {
    }
    %c0_2 = arith.constant 0 : index
    %c0_3 = arith.constant 0 : index
    %c0_4 = arith.constant 0 : index
    %5 = vector.load %arg3[%c0_2, %c0_3, %c0_4] : memref<1x8x32xf32, #tpu.memory_space<vmem>>, vector<1x8x32xf32>
    %cst = arith.constant dense<0.000000e+00> : vector<8x32xf32>
    %6 = vector.multi_reduction <add>, %1, %cst [0] : vector<1x8x32xf32> to vector<8x32xf32>
    %7 = vector.shape_cast %6 : vector<8x32xf32> to vector<1x8x32xf32>
    %8 = arith.addf %5, %7 : vector<1x8x32xf32>
    %c0_5 = arith.constant 0 : index
    %c0_6 = arith.constant 0 : index
    %c0_7 = arith.constant 0 : index
    %9 = vector.load %arg3[%c0_5, %c0_6, %c0_7] : memref<1x8x32xf32, #tpu.memory_space<vmem>>, vector<1x8x32xf32>
    tpu.vector_store %arg3[%c0_5, %c0_6, %c0_7], %8 {strides = array<i32>} : memref<1x8x32xf32, #tpu.memory_space<vmem>>, vector<1x8x32xf32>,
    %c0_8 = arith.constant 0 : index
    %c0_9 = arith.constant 0 : index
    %c0_10 = arith.constant 0 : index
    %10 = vector.load %arg4[%c0_8, %c0_9, %c0_10] : memref<1x8x32xf32, #tpu.memory_space<vmem>>, vector<1x8x32xf32>
    %cst_11 = arith.constant dense<0x7F800000> : vector<8x32xf32>
    %11 = vector.multi_reduction <minimumf>, %1, %cst_11 [0] : vector<1x8x32xf32> to vector<8x32xf32>
    %12 = vector.shape_cast %11 : vector<8x32xf32> to vector<1x8x32xf32>
    %13 = arith.minimumf %10, %12 : vector<1x8x32xf32>
    %c0_12 = arith.constant 0 : index
    %c0_13 = arith.constant 0 : index
    %c0_14 = arith.constant 0 : index
    %14 = vector.load %arg4[%c0_12, %c0_13, %c0_14] : memref<1x8x32xf32, #tpu.memory_space<vmem>>, vector<1x8x32xf32>
    tpu.vector_store %arg4[%c0_12, %c0_13, %c0_14], %13 {strides = array<i32>} : memref<1x8x32xf32, #tpu.memory_space<vmem>>, vector<1x8x32xf32>,
    %c0_15 = arith.constant 0 : index
    %c0_16 = arith.constant 0 : index
    %c0_17 = arith.constant 0 : index
    %15 = vector.load %arg5[%c0_15, %c0_16, %c0_17] : memref<1x8x32xf32, #tpu.memory_space<vmem>>, vector<1x8x32xf32>
    %cst_18 = arith.constant dense<0xFF800000> : vector<8x32xf32>
    %16 = vector.multi_reduction <maximumf>, %1, %cst_18 [0] : vector<1x8x32xf32> to vector<8x32xf32>
    %17 = vector.shape_cast %16 : vector<8x32xf32> to vector<1x8x32xf32>
    %18 = arith.maximumf %15, %17 : vector<1x8x32xf32>
    %c0_19 = arith.constant 0 : index
    %c0_20 = arith.constant 0 : index
    %c0_21 = arith.constant 0 : index
    %19 = vector.load %arg5[%c0_19, %c0_20, %c0_21] : memref<1x8x32xf32, #tpu.memory_space<vmem>>, vector<1x8x32xf32>
    tpu.vector_store %arg5[%c0_19, %c0_20, %c0_21], %18 {strides = array<i32>} : memref<1x8x32xf32, #tpu.memory_space<vmem>>, vector<1x8x32xf32>,
    return
  }
  func.func @transform_0(%arg0: i32, %arg1: i32) -> (i32, i32) {
    %c1_i32 = arith.constant 1 : i32
    %0 = arith.muli %arg0, %c1_i32 : i32
    %1 = arith.addi %0, %arg1 : i32
    %c0_i32 = arith.constant 0 : i32
    %c0_i32_0 = arith.constant 0 : i32
    return %1, %c0_i32 : i32, i32
  }
  func.func @transform_1(%arg0: i32, %arg1: i32) -> (i32, i32, i32) {
    %c0_i32 = arith.constant 0 : i32
    %c0_i32_0 = arith.constant 0 : i32
    %c0_i32_1 = arith.constant 0 : i32
    return %arg0, %c0_i32, %c0_i32_0 : i32, i32, i32
  }
  func.func @transform_2(%arg0: i32, %arg1: i32) -> (i32, i32, i32) {
    %c0_i32 = arith.constant 0 : i32
    %c0_i32_0 = arith.constant 0 : i32
    %c0_i32_1 = arith.constant 0 : i32
    return %arg0, %c0_i32, %c0_i32_0 : i32, i32, i32
  }
  func.func @transform_3(%arg0: i32, %arg1: i32) -> (i32, i32, i32) {
    %c0_i32 = arith.constant 0 : i32
    %c0_i32_0 = arith.constant 0 : i32
    %c0_i32_1 = arith.constant 0 : i32
    return %arg0, %c0_i32, %c0_i32_0 : i32, i32, i32
  }
}

</mosaic_0001>

<llo_original>
// kernel: tpu_custom_call.1
$region0: #{tpu_custom_call.1}
  #allocation0 [shape = 'u32[]', space=smem, size = 0x4, offset = 0x4, fixed_abs, tag = 'smem constant byte address 0x4 - core index']
  #allocation1 [shape = 'u32[144,128]{1,0:T(1,128)}', space=vmem, size = 0x12000, scoped, tag = 'internal scratch']
  %s0 = inlined_call_operand.hbm [shape: f32[8,32], index: 0, kind: input, shape index: {}]
  %s1 = inlined_call_operand.hbm [shape: f32[1,8,32], index: 1, kind: output, shape index: {0}]
  %s2 = inlined_call_operand.hbm [shape: f32[1,8,32], index: 2, kind: output, shape index: {1}]
  %s3 = inlined_call_operand.hbm [shape: f32[1,8,32], index: 3, kind: output, shape index: {2}]
  %4 = xla_tuple %s1, %s2, %s3
  %s5 = sld [smem:[#allocation0]]
  $region38: #{tpu_custom_call.1} parent=0
    _
  %s7 = ssub.s32 1, %s5
  %s8 = scalar_select 0, %s7, %s5
  $region1: #{tpu_custom_call.1} parent=0
    #allocation2 [shape = 'u8[4096]{0}', space=vmem, size = 0x1000, scoped, tag = 'input window, operand 0, single buffered']
    #allocation3 [shape = 's32[1]{0}', space=sflag, size = 0x4, scoped, tag = 'scoped memory for tpu_custom_call.1']
    #allocation4 [shape = 's32[1]{0}', space=sflag, size = 0x4, scoped, tag = 'scoped memory for tpu_custom_call.1']
    #allocation5 [shape = 'u8[4096]{0}', space=vmem, size = 0x1000, scoped, tag = 'output window, operand 0, single buffered']
    #allocation6 [shape = 'u8[4096]{0}', space=vmem, size = 0x1000, scoped, tag = 'output window, operand 1, single buffered']
    #allocation7 [shape = 's32[1]{0}', space=sflag, size = 0x4, scoped, tag = 'scoped memory for tpu_custom_call.1']
    #allocation8 [shape = 'u8[4096]{0}', space=vmem, size = 0x1000, scoped, tag = 'output window, operand 2, single buffered']
    %9 = vsyncpa [#allocation3], 0
    %10 = vsyncpa [#allocation4], 0
    %11 = vsyncpa [#allocation7], 0
    // Predicated region
    $region2: #{tpu_custom_call.1} parent=1 // pred_check
      _
    $region3: #{tpu_custom_call.1} parent=1 // pred_check_branch
      %13 = sbr.rel (0) target = $region5
    $region4: #{tpu_custom_call.1} parent=1 // pred_region
      %s14 = sadd.s32 0, 0
      %s16 = ssub.s32 128, 128
      %17 = vsyncadd [#allocation3], %s16
      %s18 = smul.addr %s14, 128
      %s19 = scalar_lea.hbm %s0, %s18
      %s21 = sshll.u32 [#allocation2], 4
      %s22 = int_to_ptr.vmem [resolvable:$true] %s21
      %24 = dma.hbm_to_vmem [thread:$0]  %s19, 128, %s22, [#allocation3]
    $region5: #{tpu_custom_call.1} parent=1 // pred_fallthru
      _
    // Predicated region
    $region6: #{tpu_custom_call.1} parent=1 // pred_check
      _
    $region7: #{tpu_custom_call.1} parent=1 // pred_check_branch
      %26 = sbr.rel (0) target = $region9
    $region8: #{tpu_custom_call.1} parent=1 // pred_region
      %27 = dma.done [#allocation3], 128
    $region9: #{tpu_custom_call.1} parent=1 // pred_fallthru
      _
    %s28 = sadd.s32 0, 0
    %v29 = vld [vmem:[#allocation2] sm:$0xff]
    %p30 = scmp.eq.s32.totalorder 0, 0
    // Predicated region
    $region10: #{tpu_custom_call.1} parent=1 // pred_check
      %p31 = pneg %p30
    $region11: #{tpu_custom_call.1} parent=1 // pred_check_branch
      %33 = sbr.rel (%p31) target = $region13
    $region12: #{tpu_custom_call.1} parent=1 // pred_region
      %vm34 = vcmask 261120
      %35 = vst.msk [vmem:[#allocation5] sm:$0xff] %vm34, 0.0
      %36 = vst.msk [vmem:[#allocation6] sm:$0xff] %vm34, inf
      %37 = vst.msk [vmem:[#allocation8] sm:$0xff] %vm34, -inf
    $region13: #{tpu_custom_call.1} parent=1 // pred_fallthru
      _
    %v38 = vld [vmem:[#allocation5] sm:$0xff]
    %v39 = vadd.f32 %v29, 0.0
    %v40 = vadd.f32 %v38, %v39
    %vm41 = vcmask 261120
    %42 = vst.msk [vmem:[#allocation5] sm:$0xff] %vm41, %v40
    %v43 = vld [vmem:[#allocation6] sm:$0xff]
    %v44 = vmin.f32 %v43, %v29
    %45 = vst.msk [vmem:[#allocation6] sm:$0xff] %vm41, %v44
    %v46 = vld [vmem:[#allocation8] sm:$0xff]
    %v47 = vmax.f32 %v46, %v29
    %48 = vst.msk [vmem:[#allocation8] sm:$0xff] %vm41, %v47
    // Predicated region
    $region14: #{tpu_custom_call.1} parent=1 // pred_check
      _
    $region15: #{tpu_custom_call.1} parent=1 // pred_check_branch
      %50 = sbr.rel (0) target = $region17
    $region16: #{tpu_custom_call.1} parent=1 // pred_region
      %s52 = ssub.s32 128, 128
      %53 = vsyncadd [#allocation4], %s52
      %s55 = sshll.u32 [#allocation5], 4
      %s56 = int_to_ptr.vmem [resolvable:$true] %s55
      %58 = dma.vmem_to_hbm [thread:$0]  %s56, 128, %s1, [#allocation4]
    $region17: #{tpu_custom_call.1} parent=1 // pred_fallthru
      _
    // Predicated region
    $region18: #{tpu_custom_call.1} parent=1 // pred_check
      _
    $region19: #{tpu_custom_call.1} parent=1 // pred_check_branch
      %60 = sbr.rel (0) target = $region21
    $region20: #{tpu_custom_call.1} parent=1 // pred_region
      %s62 = ssub.s32 128, 128
      %63 = vsyncadd [#allocation7], %s62
      %s65 = sshll.u32 [#allocation6], 4
      %s66 = int_to_ptr.vmem [resolvable:$true] %s65
      %68 = dma.vmem_to_hbm [thread:$0]  %s66, 128, %s2, [#allocation7]
    $region21: #{tpu_custom_call.1} parent=1 // pred_fallthru
      _
    // Predicated region
    $region22: #{tpu_custom_call.1} parent=1 // pred_check
      _
    $region23: #{tpu_custom_call.1} parent=1 // pred_check_branch
      %70 = sbr.rel (0) target = $region25
    $region24: #{tpu_custom_call.1} parent=1 // pred_region
      %s72 = ssub.s32 128, 128
      %73 = vsyncadd [#allocation7], %s72
      %s75 = sshll.u32 [#allocation8], 4
      %s76 = int_to_ptr.vmem [resolvable:$true] %s75
      %78 = dma.vmem_to_hbm [thread:$0]  %s76, 128, %s3, [#allocation7]
    $region25: #{tpu_custom_call.1} parent=1 // pred_fallthru
      _
    // Predicated region
    $region26: #{tpu_custom_call.1} parent=1 // pred_check
      _
    $region27: #{tpu_custom_call.1} parent=1 // pred_check_branch
      %80 = sbr.rel (0) target = $region29
    $region28: #{tpu_custom_call.1} parent=1 // pred_region
      %81 = dma.done [#allocation4], 128
    $region29: #{tpu_custom_call.1} parent=1 // pred_fallthru
      _
    // Predicated region
    $region30: #{tpu_custom_call.1} parent=1 // pred_check
      _
    $region31: #{tpu_custom_call.1} parent=1 // pred_check_branch
      %83 = sbr.rel (0) target = $region33
    $region32: #{tpu_custom_call.1} parent=1 // pred_region
      %84 = dma.done [#allocation7], 128
    $region33: #{tpu_custom_call.1} parent=1 // pred_fallthru
      _
    // Predicated region
    $region34: #{tpu_custom_call.1} parent=1 // pred_check
      _
    $region35: #{tpu_custom_call.1} parent=1 // pred_check_branch
      %86 = sbr.rel (0) target = $region37
    $region36: #{tpu_custom_call.1} parent=1 // pred_region
      %87 = dma.done [#allocation7], 128
    $region37: #{tpu_custom_call.1} parent=1 // pred_fallthru
      _
    %88 = vsyncpa [#allocation3], 1
    %89 = vsyncpa [#allocation4], 1
    %90 = vsyncpa [#allocation7], 1

</llo_original>
